<compile_context>
chip_gen: v7x
topology: tpu7x:2x2x1
jax: 0.10.0
libtpu: 0.0.40
codegen_flags: <defaults>
</compile_context>

<pallas_src>
import functools

import jax
import jax.numpy as jnp
from jax.experimental import pallas as pl
from jax.experimental.pallas import tpu as pltpu


# ----------------------------------------------------------------------------
# helpers
# ----------------------------------------------------------------------------
def round_up(v, m):
    return (v + m - 1) // m * m


def pad2(x, rows, cols):
    r, c = x.shape
    return jnp.pad(x, ((0, rows - r), (0, cols - c)))


def _itemsize(dt):
    return 2 if dt == jnp.bfloat16 else 4


# ----------------------------------------------------------------------------
# Path A: fully fused multi-layer GCN kernel (small graphs: everything in VMEM)
# ----------------------------------------------------------------------------
def gcn_fused(a_p, x_p, params_p):
    """All layers in one pallas_call; A_hat and activations stay in VMEM."""
    num_layers = len(params_p)
    np_, _ = x_p.shape
    cout_p = params_p[-1][0].shape[1]

    def kernel(*refs):
        a_ref, x_ref = refs[0], refs[1]
        o_ref = refs[-1]
        a = a_ref[...]          # bf16 (NP, NP)
        h = x_ref[...]          # bf16 (NP, F0P)
        for li in range(num_layers):
            w = refs[2 + 2 * li][...]     # bf16 (Fin_p, Fout_p)
            b = refs[3 + 2 * li][...]     # f32  (1, Fout_p)
            # XW computed exactly once per layer (hoisted; no per-tile redo).
            xw = jnp.dot(h, w, preferred_element_type=jnp.float32)
            y = jnp.dot(a, xw.astype(jnp.bfloat16),
                        preferred_element_type=jnp.float32) + b
            if li < num_layers - 1:
                h = jnp.maximum(y, 0.0).astype(jnp.bfloat16)
            else:
                o_ref[...] = y.astype(o_ref.dtype)

    flops = 0
    bytes_accessed = a_p.size * 2 + x_p.size * 2 + np_ * cout_p * 4
    for w_p, b_p in params_p:
        k_l, c_l = w_p.shape
        flops += 2 * np_ * k_l * c_l + 2 * np_ * np_ * c_l
        bytes_accessed += w_p.size * 2 + b_p.size * 4

    inputs = [a_p, x_p]
    for w_p, b_p in params_p:
        inputs += [w_p, b_p]

    return pl.pallas_call(
        kernel,
        out_shape=jax.ShapeDtypeStruct((np_, cout_p), jnp.float32),
        compiler_params=pltpu.CompilerParams(
            vmem_limit_bytes=32 * 1024 * 1024),
        cost_estimate=pl.CostEstimate(
            flops=flops, transcendentals=0, bytes_accessed=bytes_accessed),
    )(*inputs)


# ----------------------------------------------------------------------------
# Path B: tiled matmul with K-reduction accumulator + fused bias/relu epilogue
# ----------------------------------------------------------------------------
def _mm_epilogue_kernel(a_ref, b_ref, bias_ref, o_ref, acc_ref, *, apply_relu):
    k = pl.program_id(2)

    @pl.when(k == 0)
    def _init():
        acc_ref[...] = jnp.zeros_like(acc_ref)

    acc_ref[...] += jnp.dot(a_ref[...], b_ref[...],
                            preferred_element_type=jnp.float32)

    @pl.when(k == pl.num_programs(2) - 1)
    def _finalize():
        y = acc_ref[...] + bias_ref[...]
        if apply_relu:
            y = jnp.maximum(y, 0.0)
        o_ref[...] = y.astype(o_ref.dtype)


def matmul_epilogue(a, b, bias, *, apply_relu, out_dtype,
                    tm=256, tn=128, tk=256):
    """out = relu?(a @ b + bias), tiled over (M, N, K); K is the reduction axis."""
    m, k_dim = a.shape
    _, n = b.shape
    tm, tn, tk = min(tm, m), min(tn, n), min(tk, k_dim)
    assert m % tm == 0 and n % tn == 0 and k_dim % tk == 0

    if bias is None:
        bias = jnp.zeros((1, n), jnp.float32)
    else:
        bias = bias.reshape(1, n).astype(jnp.float32)

    kernel = functools.partial(_mm_epilogue_kernel, apply_relu=apply_relu)
    bytes_accessed = (a.size * a.dtype.itemsize + b.size * b.dtype.itemsize
                      + bias.size * 4 + m * n * _itemsize(out_dtype))
    return pl.pallas_call(
        kernel,
        out_shape=jax.ShapeDtypeStruct((m, n), out_dtype),
        grid=(m // tm, n // tn, k_dim // tk),
        in_specs=[
            pl.BlockSpec((tm, tk), lambda i, j, k: (i, k)),
            pl.BlockSpec((tk, tn), lambda i, j, k: (k, j)),
            pl.BlockSpec((1, tn), lambda i, j, k: (0, j)),
        ],
        out_specs=pl.BlockSpec((tm, tn), lambda i, j, k: (i, j)),
        scratch_shapes=[pltpu.VMEM((tm, tn), jnp.float32)],
        compiler_params=pltpu.CompilerParams(
            dimension_semantics=("parallel", "parallel", "arbitrary"),
            vmem_limit_bytes=32 * 1024 * 1024),
        cost_estimate=pl.CostEstimate(
            flops=2 * m * n * k_dim, transcendentals=0,
            bytes_accessed=bytes_accessed),
    )(a, b, bias)


def gcn_tiled(a_p, x_p, params_p):
    """Per-layer: XW once (no per-row-tile recompute), then row/K-tiled A_hat @ XW."""
    h = x_p
    num_layers = len(params_p)
    for li, (w_p, b_p) in enumerate(params_p):
        last = li == num_layers - 1
        # 1) XW hoisted: computed exactly once per layer.
        xw = matmul_epilogue(h, w_p, None, apply_relu=False,
                             out_dtype=jnp.bfloat16)
        # 2) A_hat @ XW with K-reduction accumulator; bias (+relu) fused.
        h = matmul_epilogue(a_p, xw, b_p, apply_relu=not last,
                            out_dtype=jnp.float32 if last else jnp.bfloat16)
    return h


# ----------------------------------------------------------------------------
# GCN forward (padding / dtype plumbing + path selection)
# ----------------------------------------------------------------------------
def gcn_forward(params, x, a_hat, dropout_p=0.0, *, force_tiled=False):
    # dropout: inference mode (identity).
    # TODO(synk): training-mode stochastic dropout not reproduced.
    del dropout_p
    n = a_hat.shape[0]
    np_ = round_up(n, 128)
    dims = [params[0][0].shape[0]] + [w.shape[1] for w, _ in params]
    dims_p = [round_up(d, 128) for d in dims]

    # lane-dense, MXU-aligned, bf16 MXU inputs (f32 accumulation inside kernels)
    a_p = pad2(a_hat, np_, np_).astype(jnp.bfloat16)
    x_p = pad2(x, np_, dims_p[0]).astype(jnp.bfloat16)
    params_p = []
    for li, (w, b) in enumerate(params):
        w_p = pad2(w, dims_p[li], dims_p[li + 1]).astype(jnp.bfloat16)
        b_p = pad2(b.reshape(1, -1), 1, dims_p[li + 1]).astype(jnp.float32)
        params_p.append((w_p, b_p))

    # rough resident-VMEM estimate for the fused path
    fused_bytes = (2 * np_ * np_                      # A_hat bf16
                   + 3 * 2 * np_ * max(dims_p)        # activations (headroom)
                   + sum(w.size * 2 + b.size * 4 for w, b in params_p)
                   + np_ * dims_p[-1] * 4)            # f32 output
    if (not force_tiled) and fused_bytes < 24 * 1024 * 1024:
        out_p = gcn_fused(a_p, x_p, params_p)
    else:
        out_p = gcn_tiled(a_p, x_p, params_p)
    return out_p[:n, :dims[-1]]


# ----------------------------------------------------------------------------
# parameter init, adjacency construction, pure-JAX reference
# ----------------------------------------------------------------------------
def glorot_uniform(key, fan_in, fan_out):
    limit = jnp.sqrt(6.0 / (fan_in + fan_out))
    return jax.random.uniform(key, (fan_in, fan_out), jnp.float32, -limit, limit)


def init_gcn_params(key, in_channels, hidden_channels, out_channels, num_layers):
    dims = [in_channels] + [hidden_channels] * (num_layers - 1) + [out_channels]
    params = []
    for li in range(num_layers):
        key, sub = jax.random.split(key)
        w = glorot_uniform(sub, dims[li], dims[li + 1])
        b = jnp.zeros((dims[li + 1],), jnp.float32)
        params.append((w, b))
    return params


def build_normalized_adjacency(key, num_nodes, avg_degree=4):
    """Dense symmetric A_hat = D^-1/2 (A + I) D^-1/2  (gcn_norm, cached)."""
    num_edges = num_nodes * avg_degree
    k1, k2 = jax.random.split(key)
    src = jax.random.randint(k1, (num_edges,), 0, num_nodes)
    dst = jax.random.randint(k2, (num_edges,), 0, num_nodes)
    adj = jnp.zeros((num_nodes, num_nodes), jnp.float32)
    adj = adj.at[src, dst].set(1.0)
    adj = jnp.maximum(adj, adj.T)
    adj = adj + jnp.eye(num_nodes, dtype=jnp.float32)
    deg = adj.sum(axis=1)
    d_inv_sqrt = 1.0 / jnp.sqrt(deg)
    return adj * d_inv_sqrt[:, None] * d_inv_sqrt[None, :]


def gcn_reference(params, x, a_hat):
    """Pure-JAX reference mirroring kernel numerics (bf16 MXU inputs, f32 acc)."""
    def bdot(a, b):
        return jnp.dot(a.astype(jnp.bfloat16), b.astype(jnp.bfloat16),
                       preferred_element_type=jnp.float32)
    h = x
    num_layers = len(params)
    for li, (w, b) in enumerate(params):
        y = bdot(a_hat, bdot(h, w)) + b
        h = jnp.maximum(y, 0.0) if li < num_layers - 1 else y
    return h


# ----------------------------------------------------------------------------
# main
# ----------------------------------------------------------------------------
if __name__ == "__main__":
    key = jax.random.PRNGKey(0)
    k_x, k_adj, k_p, k_x2, k_adj2 = jax.random.split(key, 5)

    num_nodes = 64
    in_channels = 16
    hidden_channels = 32
    out_channels = 8
    num_layers = 3
    dropout = 0.5  # identity at inference

    x = jax.random.normal(k_x, (num_nodes, in_channels), jnp.float32)
    a_hat = build_normalized_adjacency(k_adj, num_nodes)
    params = init_gcn_params(k_p, in_channels, hidden_channels,
                             out_channels, num_layers)

    # --- small case: fully fused single-kernel path ---
    out = gcn_forward(params, x, a_hat, dropout)
    out = jax.block_until_ready(out)
    ref = gcn_reference(params, x, a_hat)
    assert out.shape == (num_nodes, out_channels)
    assert jnp.allclose(out, ref, atol=1e-2, rtol=1e-2), \
        float(jnp.max(jnp.abs(out - ref)))

    # --- larger case: exercises the tiled / K-reduction accumulator path ---
    num_nodes2 = 512
    x2 = jax.random.normal(k_x2, (num_nodes2, in_channels), jnp.float32)
    a_hat2 = build_normalized_adjacency(k_adj2, num_nodes2)
    out2 = gcn_forward(params, x2, a_hat2, dropout, force_tiled=True)
    out2 = jax.block_until_ready(out2)
    ref2 = gcn_reference(params, x2, a_hat2)
    assert out2.shape == (num_nodes2, out_channels)
    assert jnp.allclose(out2, ref2, atol=1e-2, rtol=1e-2), \
        float(jnp.max(jnp.abs(out2 - ref2)))

    print("KERNEL_OK")
</pallas_src>

<mosaic_0001>
module attributes {stable_mosaic.version = 11 : i64} {
  func.func @kernel(%arg0: memref<128x128xbf16, #tpu.memory_space<vmem>>, %arg1: memref<128x128xbf16, #tpu.memory_space<vmem>>, %arg2: memref<128x128xbf16, #tpu.memory_space<vmem>>, %arg3: memref<1x128xf32, #tpu.memory_space<vmem>>, %arg4: memref<128x128xbf16, #tpu.memory_space<vmem>>, %arg5: memref<1x128xf32, #tpu.memory_space<vmem>>, %arg6: memref<128x128xbf16, #tpu.memory_space<vmem>>, %arg7: memref<1x128xf32, #tpu.memory_space<vmem>>, %arg8: memref<128x128xf32, #tpu.memory_space<vmem>>) attributes {dimension_semantics = [], scalar_prefetch = 0 : i64, scratch_operands = 0 : i64, tpu.core_type = #tpu.core_type<tc>} {
    %c0 = arith.constant 0 : index
    %c0_0 = arith.constant 0 : index
    %0 = vector.load %arg0[%c0, %c0_0] : memref<128x128xbf16, #tpu.memory_space<vmem>>, vector<128x128xbf16>
    %c0_1 = arith.constant 0 : index
    %c0_2 = arith.constant 0 : index
    %1 = vector.load %arg1[%c0_1, %c0_2] : memref<128x128xbf16, #tpu.memory_space<vmem>>, vector<128x128xbf16>
    %c0_3 = arith.constant 0 : index
    %c0_4 = arith.constant 0 : index
    %2 = vector.load %arg2[%c0_3, %c0_4] : memref<128x128xbf16, #tpu.memory_space<vmem>>, vector<128x128xbf16>
    %c0_5 = arith.constant 0 : index
    %c0_6 = arith.constant 0 : index
    %3 = vector.load %arg3[%c0_5, %c0_6] : memref<1x128xf32, #tpu.memory_space<vmem>>, vector<1x128xf32>
    %cst = arith.constant dense<0.000000e+00> : vector<128x128xf32>
    %4 = tpu.matmul %1, %2, %cst {dimension_numbers = #tpu.dot_dimension_numbers<[1], [0], [0], [1], [0, 0, 1, 1], [], []>} : vector<128x128xbf16>, vector<128x128xbf16>, vector<128x128xf32> -> vector<128x128xf32>
    %5 = arith.truncf %4 : vector<128x128xf32> to vector<128x128xbf16>
    %cst_7 = arith.constant dense<0.000000e+00> : vector<128x128xf32>
    %6 = tpu.matmul %0, %5, %cst_7 {dimension_numbers = #tpu.dot_dimension_numbers<[1], [0], [0], [1], [0, 0, 1, 1], [], []>} : vector<128x128xbf16>, vector<128x128xbf16>, vector<128x128xf32> -> vector<128x128xf32>
    %7 = vector.broadcast %3 : vector<1x128xf32> to vector<128x128xf32>
    %8 = arith.addf %6, %7 : vector<128x128xf32>
    %cst_8 = arith.constant 0.000000e+00 : f32
    %9 = vector.broadcast %cst_8 : f32 to vector<128x128xf32>
    %10 = arith.maximumf %8, %9 : vector<128x128xf32>
    %11 = arith.truncf %10 : vector<128x128xf32> to vector<128x128xbf16>
    %c0_9 = arith.constant 0 : index
    %c0_10 = arith.constant 0 : index
    %12 = vector.load %arg4[%c0_9, %c0_10] : memref<128x128xbf16, #tpu.memory_space<vmem>>, vector<128x128xbf16>
    %c0_11 = arith.constant 0 : index
    %c0_12 = arith.constant 0 : index
    %13 = vector.load %arg5[%c0_11, %c0_12] : memref<1x128xf32, #tpu.memory_space<vmem>>, vector<1x128xf32>
    %cst_13 = arith.constant dense<0.000000e+00> : vector<128x128xf32>
    %14 = tpu.matmul %11, %12, %cst_13 {dimension_numbers = #tpu.dot_dimension_numbers<[1], [0], [0], [1], [0, 0, 1, 1], [], []>} : vector<128x128xbf16>, vector<128x128xbf16>, vector<128x128xf32> -> vector<128x128xf32>
    %15 = arith.truncf %14 : vector<128x128xf32> to vector<128x128xbf16>
    %cst_14 = arith.constant dense<0.000000e+00> : vector<128x128xf32>
    %16 = tpu.matmul %0, %15, %cst_14 {dimension_numbers = #tpu.dot_dimension_numbers<[1], [0], [0], [1], [0, 0, 1, 1], [], []>} : vector<128x128xbf16>, vector<128x128xbf16>, vector<128x128xf32> -> vector<128x128xf32>
    %17 = vector.broadcast %13 : vector<1x128xf32> to vector<128x128xf32>
    %18 = arith.addf %16, %17 : vector<128x128xf32>
    %cst_15 = arith.constant 0.000000e+00 : f32
    %19 = vector.broadcast %cst_15 : f32 to vector<128x128xf32>
    %20 = arith.maximumf %18, %19 : vector<128x128xf32>
    %21 = arith.truncf %20 : vector<128x128xf32> to vector<128x128xbf16>
    %c0_16 = arith.constant 0 : index
    %c0_17 = arith.constant 0 : index
    %22 = vector.load %arg6[%c0_16, %c0_17] : memref<128x128xbf16, #tpu.memory_space<vmem>>, vector<128x128xbf16>
    %c0_18 = arith.constant 0 : index
    %c0_19 = arith.constant 0 : index
    %23 = vector.load %arg7[%c0_18, %c0_19] : memref<1x128xf32, #tpu.memory_space<vmem>>, vector<1x128xf32>
    %cst_20 = arith.constant dense<0.000000e+00> : vector<128x128xf32>
    %24 = tpu.matmul %21, %22, %cst_20 {dimension_numbers = #tpu.dot_dimension_numbers<[1], [0], [0], [1], [0, 0, 1, 1], [], []>} : vector<128x128xbf16>, vector<128x128xbf16>, vector<128x128xf32> -> vector<128x128xf32>
    %25 = arith.truncf %24 : vector<128x128xf32> to vector<128x128xbf16>
    %cst_21 = arith.constant dense<0.000000e+00> : vector<128x128xf32>
    %26 = tpu.matmul %0, %25, %cst_21 {dimension_numbers = #tpu.dot_dimension_numbers<[1], [0], [0], [1], [0, 0, 1, 1], [], []>} : vector<128x128xbf16>, vector<128x128xbf16>, vector<128x128xf32> -> vector<128x128xf32>
    %27 = vector.broadcast %23 : vector<1x128xf32> to vector<128x128xf32>
    %28 = arith.addf %26, %27 : vector<128x128xf32>
    %c0_22 = arith.constant 0 : index
    %c0_23 = arith.constant 0 : index
    %29 = vector.load %arg8[%c0_22, %c0_23] : memref<128x128xf32, #tpu.memory_space<vmem>>, vector<128x128xf32>
    tpu.vector_store %arg8[%c0_22, %c0_23], %28 {strides = array<i32>} : memref<128x128xf32, #tpu.memory_space<vmem>>, vector<128x128xf32>,
    return
  }
}

</mosaic_0001>

<llo_original>
// kernel: tpu_custom_call.1
$region0: #{tpu_custom_call.1}
  #allocation0 [shape = 'u32[]', space=smem, size = 0x4, offset = 0x4, fixed_abs, tag = 'smem constant byte address 0x4 - core index']
  #allocation1 [shape = 'u32[144,128]{1,0:T(1,128)}', space=vmem, size = 0x12000, scoped, tag = 'internal scratch']
  %s0 = inlined_call_operand.hbm [shape: bf16[128,128], index: 0, kind: input, shape index: {}]
  %s1 = inlined_call_operand.hbm [shape: bf16[128,128], index: 1, kind: input, shape index: {}]
  %s2 = inlined_call_operand.hbm [shape: bf16[128,128], index: 2, kind: input, shape index: {}]
  %s3 = inlined_call_operand.vmem [shape: f32[1,128], index: 3, kind: input, shape index: {}]
  %s4 = inlined_call_operand.hbm [shape: bf16[128,128], index: 4, kind: input, shape index: {}]
  %s5 = inlined_call_operand.vmem [shape: f32[1,128], index: 5, kind: input, shape index: {}]
  %s6 = inlined_call_operand.hbm [shape: bf16[128,128], index: 6, kind: input, shape index: {}]
  %s7 = inlined_call_operand.vmem [shape: f32[1,128], index: 7, kind: input, shape index: {}]
  %s8 = inlined_call_operand.hbm [shape: f32[128,128], index: 8, kind: output, shape index: {}]
  %s9 = sld [smem:[#allocation0]]
  $region62: #{tpu_custom_call.1} parent=0
    _
  %s11 = ssub.s32 1, %s9
  %s12 = scalar_select 0, %s11, %s9
  $region1: #{tpu_custom_call.1} parent=0
    #allocation2 [shape = 'u8[32768]{0}', space=vmem, size = 0x8000, scoped, tag = 'input window, operand 0, single buffered']
    #allocation3 [shape = 's32[1]{0}', space=sflag, size = 0x4, scoped, tag = 'scoped memory for tpu_custom_call.1']
    #allocation4 [shape = 's32[1]{0}', space=sflag, size = 0x4, scoped, tag = 'scoped memory for tpu_custom_call.1']
    #allocation5 [shape = 'u8[32768]{0}', space=vmem, size = 0x8000, scoped, tag = 'input window, operand 1, single buffered']
    #allocation6 [shape = 's32[1]{0}', space=sflag, size = 0x4, scoped, tag = 'scoped memory for tpu_custom_call.1']
    #allocation7 [shape = 'u8[32768]{0}', space=vmem, size = 0x8000, scoped, tag = 'input window, operand 2, single buffered']
    #allocation8 [shape = 'u8[32768]{0}', space=vmem, size = 0x8000, scoped, tag = 'input window, operand 4, single buffered']
    #allocation9 [shape = 's32[1]{0}', space=sflag, size = 0x4, scoped, tag = 'scoped memory for tpu_custom_call.1']
    #allocation10 [shape = 'u8[32768]{0}', space=vmem, size = 0x8000, scoped, tag = 'input window, operand 6, single buffered']
    #allocation11 [shape = 'u8[65536]{0}', space=vmem, size = 0x10000, scoped, tag = 'output window, operand 0, single buffered']
    %13 = vsyncpa [#allocation3], 0
    %14 = vsyncpa [#allocation6], 0
    %15 = vsyncpa [#allocation9], 0
    %16 = vsyncpa [#allocation4], 0
    // Predicated region
    $region2: #{tpu_custom_call.1} parent=1 // pred_check
      _
    $region3: #{tpu_custom_call.1} parent=1 // pred_check_branch
      %18 = sbr.rel (0) target = $region5
    $region4: #{tpu_custom_call.1} parent=1 // pred_region
      %s20 = ssub.s32 1024, 1024
      %21 = vsyncadd [#allocation3], %s20
      %s22 = sshll.u32 [#allocation2], 4
      %s23 = int_to_ptr.vmem [resolvable:$true] %s22
      %28 = dma.hbm_to_vmem [thread:$0]  %s0, 1024, %s23, [#allocation3], 64, 64, 4
    $region5: #{tpu_custom_call.1} parent=1 // pred_fallthru
      _
    // Predicated region
    $region6: #{tpu_custom_call.1} parent=1 // pred_check
      _
    $region7: #{tpu_custom_call.1} parent=1 // pred_check_branch
      %30 = sbr.rel (0) target = $region9
    $region8: #{tpu_custom_call.1} parent=1 // pred_region
      %s32 = ssub.s32 1024, 1024
      %33 = vsyncadd [#allocation6], %s32
      %s34 = sshll.u32 [#allocation5], 4
      %s35 = int_to_ptr.vmem [resolvable:$true] %s34
      %40 = dma.hbm_to_vmem [thread:$0]  %s1, 1024, %s35, [#allocation6], 64, 64, 4
    $region9: #{tpu_custom_call.1} parent=1 // pred_fallthru
      _
    // Predicated region
    $region10: #{tpu_custom_call.1} parent=1 // pred_check
      _
    $region11: #{tpu_custom_call.1} parent=1 // pred_check_branch
      %42 = sbr.rel (0) target = $region13
    $region12: #{tpu_custom_call.1} parent=1 // pred_region
      %s44 = ssub.s32 1024, 1024
      %45 = vsyncadd [#allocation6], %s44
      %s46 = sshll.u32 [#allocation7], 4
      %s47 = int_to_ptr.vmem [resolvable:$true] %s46
      %52 = dma.hbm_to_vmem [thread:$0]  %s2, 1024, %s47, [#allocation6], 64, 64, 4
    $region13: #{tpu_custom_call.1} parent=1 // pred_fallthru
      _
    // Predicated region
    $region14: #{tpu_custom_call.1} parent=1 // pred_check
      _
    $region15: #{tpu_custom_call.1} parent=1 // pred_check_branch
      %54 = sbr.rel (0) target = $region17
    $region16: #{tpu_custom_call.1} parent=1 // pred_region
      _
    $region17: #{tpu_custom_call.1} parent=1 // pred_fallthru
      _
    // Predicated region
    $region18: #{tpu_custom_call.1} parent=1 // pred_check
      _
    $region19: #{tpu_custom_call.1} parent=1 // pred_check_branch
      %56 = sbr.rel (0) target = $region21
    $region20: #{tpu_custom_call.1} parent=1 // pred_region
      %s58 = ssub.s32 1024, 1024
      %59 = vsyncadd [#allocation9], %s58
      %s60 = sshll.u32 [#allocation8], 4
      %s61 = int_to_ptr.vmem [resolvable:$true] %s60
      %66 = dma.hbm_to_vmem [thread:$0]  %s4, 1024, %s61, [#allocation9], 64, 64, 4
    $region21: #{tpu_custom_call.1} parent=1 // pred_fallthru
      _
    // Predicated region
    $region22: #{tpu_custom_call.1} parent=1 // pred_check
      _
    $region23: #{tpu_custom_call.1} parent=1 // pred_check_branch
      %68 = sbr.rel (0) target = $region25
    $region24: #{tpu_custom_call.1} parent=1 // pred_region
      _
    $region25: #{tpu_custom_call.1} parent=1 // pred_fallthru
      _
    // Predicated region
    $region26: #{tpu_custom_call.1} parent=1 // pred_check
      _
    $region27: #{tpu_custom_call.1} parent=1 // pred_check_branch
      %70 = sbr.rel (0) target = $region29
    $region28: #{tpu_custom_call.1} parent=1 // pred_region
      %s72 = ssub.s32 1024, 1024
      %73 = vsyncadd [#allocation9], %s72
      %s74 = sshll.u32 [#allocation10], 4
      %s75 = int_to_ptr.vmem [resolvable:$true] %s74
      %80 = dma.hbm_to_vmem [thread:$0]  %s6, 1024, %s75, [#allocation9], 64, 64, 4
    $region29: #{tpu_custom_call.1} parent=1 // pred_fallthru
      _
    // Predicated region
    $region30: #{tpu_custom_call.1} parent=1 // pred_check
      _
    $region31: #{tpu_custom_call.1} parent=1 // pred_check_branch
      %82 = sbr.rel (0) target = $region33
    $region32: #{tpu_custom_call.1} parent=1 // pred_region
      _
    $region33: #{tpu_custom_call.1} parent=1 // pred_fallthru
      _
    // Predicated region
    $region34: #{tpu_custom_call.1} parent=1 // pred_check
      _
    $region35: #{tpu_custom_call.1} parent=1 // pred_check_branch
      %84 = sbr.rel (0) target = $region37
    $region36: #{tpu_custom_call.1} parent=1 // pred_region
      %85 = dma.done [#allocation3], 1024
    $region37: #{tpu_custom_call.1} parent=1 // pred_fallthru
      _
    // Predicated region
    $region38: #{tpu_custom_call.1} parent=1 // pred_check
      _
    $region39: #{tpu_custom_call.1} parent=1 // pred_check_branch
      %87 = sbr.rel (0) target = $region41
    $region40: #{tpu_custom_call.1} parent=1 // pred_region
      %88 = dma.done [#allocation6], 1024
    $region41: #{tpu_custom_call.1} parent=1 // pred_fallthru
      _
    // Predicated region
    $region42: #{tpu_custom_call.1} parent=1 // pred_check
      _
    $region43: #{tpu_custom_call.1} parent=1 // pred_check_branch
      %90 = sbr.rel (0) target = $region45
    $region44: #{tpu_custom_call.1} parent=1 // pred_region
      %91 = dma.done [#allocation6], 1024
    $region45: #{tpu_custom_call.1} parent=1 // pred_fallthru
      _
    // Predicated region
    $region46: #{tpu_custom_call.1} parent=1 // pred_check
      _
    $region47: #{tpu_custom_call.1} parent=1 // pred_check_branch
      %93 = sbr.rel (0) target = $region49
    $region48: #{tpu_custom_call.1} parent=1 // pred_region
      %94 = dma.done [#allocation9], 1024
    $region49: #{tpu_custom_call.1} parent=1 // pred_fallthru
      _
    // Predicated region
    $region50: #{tpu_custom_call.1} parent=1 // pred_check
      _
    $region51: #{tpu_custom_call.1} parent=1 // pred_check_branch
      %96 = sbr.rel (0) target = $region53
    $region52: #{tpu_custom_call.1} parent=1 // pred_region
      %97 = dma.done [#allocation9], 1024
    $region53: #{tpu_custom_call.1} parent=1 // pred_fallthru
      _
    %v99 = vld [vmem:[#allocation2] sm:$0xf]
    %v100 = vld [vmem:[#allocation2 + $0x4] sm:$0xf]
    %v101 = vld [vmem:[#allocation2 + $0x8] sm:$0xf]
    %v102 = vld [vmem:[#allocation2 + $0xc] sm:$0xf]
    %v103 = vld [vmem:[#allocation2 + $0x10] sm:$0xf]
    %v104 = vld [vmem:[#allocation2 + $0x14] sm:$0xf]
    %v105 = vld [vmem:[#allocation2 + $0x18] sm:$0xf]
    %v106 = vld [vmem:[#allocation2 + $0x1c] sm:$0xf]
    %v107 = vld [vmem:[#allocation2 + $0x20] sm:$0xf]
    %v108 = vld [vmem:[#allocation2 + $0x24] sm:$0xf]
    %v109 = vld [vmem:[#allocation2 + $0x28] sm:$0xf]
    %v110 = vld [vmem:[#allocation2 + $0x2c] sm:$0xf]
    %v111 = vld [vmem:[#allocation2 + $0x30] sm:$0xf]
    %v112 = vld [vmem:[#allocation2 + $0x34] sm:$0xf]
    %v113 = vld [vmem:[#allocation2 + $0x38] sm:$0xf]
    %v114 = vld [vmem:[#allocation2 + $0x3c] sm:$0xf]
    %v115 = vld [vmem:[#allocation5] sm:$0xf]
    %v116 = vld [vmem:[#allocation5 + $0x4] sm:$0xf]
    %v117 = vld [vmem:[#allocation5 + $0x8] sm:$0xf]
    %v118 = vld [vmem:[#allocation5 + $0xc] sm:$0xf]
    %v119 = vld [vmem:[#allocation5 + $0x10] sm:$0xf]
    %v120 = vld [vmem:[#allocation5 + $0x14] sm:$0xf]
    %v121 = vld [vmem:[#allocation5 + $0x18] sm:$0xf]
    %v122 = vld [vmem:[#allocation5 + $0x1c] sm:$0xf]
    %v123 = vld [vmem:[#allocation5 + $0x20] sm:$0xf]
    %v124 = vld [vmem:[#allocation5 + $0x24] sm:$0xf]
    %v125 = vld [vmem:[#allocation5 + $0x28] sm:$0xf]
    %v126 = vld [vmem:[#allocation5 + $0x2c] sm:$0xf]
    %v127 = vld [vmem:[#allocation5 + $0x30] sm:$0xf]
    %v128 = vld [vmem:[#allocation5 + $0x34] sm:$0xf]
    %v129 = vld [vmem:[#allocation5 + $0x38] sm:$0xf]
    %v130 = vld [vmem:[#allocation5 + $0x3c] sm:$0xf]
    %v131 = vld [vmem:[#allocation7] sm:$0xf]
    %v132 = vld [vmem:[#allocation7 + $0x4] sm:$0xf]
    %v133 = vld [vmem:[#allocation7 + $0x8] sm:$0xf]
    %v134 = vld [vmem:[#allocation7 + $0xc] sm:$0xf]
    %v135 = vld [vmem:[#allocation7 + $0x10] sm:$0xf]
    %v136 = vld [vmem:[#allocation7 + $0x14] sm:$0xf]
    %v137 = vld [vmem:[#allocation7 + $0x18] sm:$0xf]
    %v138 = vld [vmem:[#allocation7 + $0x1c] sm:$0xf]
    %v139 = vld [vmem:[#allocation7 + $0x20] sm:$0xf]
    %v140 = vld [vmem:[#allocation7 + $0x24] sm:$0xf]
    %v141 = vld [vmem:[#allocation7 + $0x28] sm:$0xf]
    %v142 = vld [vmem:[#allocation7 + $0x2c] sm:$0xf]
    %v143 = vld [vmem:[#allocation7 + $0x30] sm:$0xf]
    %v144 = vld [vmem:[#allocation7 + $0x34] sm:$0xf]
    %v145 = vld [vmem:[#allocation7 + $0x38] sm:$0xf]
    %v146 = vld [vmem:[#allocation7 + $0x3c] sm:$0xf]
    %v147 = vld [vmem:[%s3] sm:$0x1]
    %v164 = vunpack.c.l.b16 %v115
    %v165 = vunpack.c.l.b16 %v116
    %v166 = vunpack.c.l.b16 %v117
    %v167 = vunpack.c.l.b16 %v118
    %v168 = vunpack.c.l.b16 %v119
    %v169 = vunpack.c.l.b16 %v120
    %v170 = vunpack.c.l.b16 %v121
    %v171 = vunpack.c.l.b16 %v122
    %v172 = vunpack.c.l.b16 %v123
    %v173 = vunpack.c.l.b16 %v124
    %v174 = vunpack.c.l.b16 %v125
    %v175 = vunpack.c.l.b16 %v126
    %v176 = vunpack.c.l.b16 %v127
    %v177 = vunpack.c.l.b16 %v128
    %v178 = vunpack.c.l.b16 %v129
    %v179 = vunpack.c.l.b16 %v130
    %v180 = vpack.c.b16 %v165, %v164
    %v181 = vpack.c.b16 %v167, %v166
    %v182 = vpack.c.b16 %v169, %v168
    %v183 = vpack.c.b16 %v171, %v170
    %v184 = vpack.c.b16 %v173, %v172
    %v185 = vpack.c.b16 %v175, %v174
    %v186 = vpack.c.b16 %v177, %v176
    %v187 = vpack.c.b16 %v179, %v178
    %v212 = vunpack.c.l.b16 %v131
    %v213 = vunpack.c.l.b16 %v132
    %v214 = vunpack.c.l.b16 %v133
    %v215 = vunpack.c.l.b16 %v134
    %v216 = vunpack.c.l.b16 %v135
    %v217 = vunpack.c.l.b16 %v136
    %v218 = vunpack.c.l.b16 %v137
    %v219 = vunpack.c.l.b16 %v138
    %v220 = vunpack.c.l.b16 %v139
    %v221 = vunpack.c.l.b16 %v140
    %v222 = vunpack.c.l.b16 %v141
    %v223 = vunpack.c.l.b16 %v142
    %v224 = vunpack.c.l.b16 %v143
    %v225 = vunpack.c.l.b16 %v144
    %v226 = vunpack.c.l.b16 %v145
    %v227 = vunpack.c.l.b16 %v146
    %v228 = vpack.c.b16 %v213, %v212
    %v229 = vpack.c.b16 %v215, %v214
    %v230 = vpack.c.b16 %v217, %v216
    %v231 = vpack.c.b16 %v219, %v218
    %v232 = vpack.c.b16 %v221, %v220
    %v233 = vpack.c.b16 %v223, %v222
    %v234 = vpack.c.b16 %v225, %v224
    %v235 = vpack.c.b16 %v227, %v226
    %244 = vmatprep.subr.bf16.mxu0 0
    %245 = vmatpush1.bf16.msra.mxu0 %v228
    %246 = vmatprep.subr.bf16.mxu0 0
    %247 = vmatpush1.bf16.msra.mxu0 %v229
    %248 = vmatprep.subr.bf16.mxu0 0
    %249 = vmatpush1.bf16.msra.mxu0 %v230
    %250 = vmatprep.subr.bf16.mxu0 0
    %251 = vmatpush1.bf16.msra.mxu0 %v231
    %252 = vmatprep.subr.bf16.mxu0 0
    %253 = vmatpush1.bf16.msra.mxu0 %v232
    %254 = vmatprep.subr.bf16.mxu0 0
    %255 = vmatpush1.bf16.msra.mxu0 %v233
    %256 = vmatprep.subr.bf16.mxu0 0
    %257 = vmatpush1.bf16.msra.mxu0 %v234
    %258 = vmatprep.subr.bf16.mxu0 0
    %259 = vmatpush1.bf16.msra.mxu0 %v235
    %260 = vmatprep.subr.bf16.mxu0 0
    %261 = vmatpush1.bf16.msra.mxu0 0
    %262 = vmatprep.subr.bf16.mxu0 0
    %263 = vmatpush1.bf16.msra.mxu0 0
    %264 = vmatprep.subr.bf16.mxu0 0
    %265 = vmatpush1.bf16.msra.mxu0 0
    %266 = vmatprep.subr.bf16.mxu0 0
    %267 = vmatpush1.bf16.msra.mxu0 0
    %268 = vmatprep.subr.bf16.mxu0 0
    %269 = vmatpush1.bf16.msra.mxu0 0
    %270 = vmatprep.subr.bf16.mxu0 0
    %271 = vmatpush1.bf16.msra.mxu0 0
    %272 = vmatprep.subr.bf16.mxu0 0
    %273 = vmatpush1.bf16.msra.mxu0 0
    %274 = vmatprep.subr.bf16.mxu0 0
    %275 = vmatpush1.bf16.msra.mxu0 0
    %276 = vmatprep.mubr.bf16.mxu0 0
    %277 = vmatmul.mubr.bf16.gmra.mrb[0].mxu0 %v180
    %v278 = vpop.f32.mrb[0].mxu0
    %v279 = vadd.f32 0.0, %v278
    %v280 = vpop.f32.mrb[0].mxu0
    %v281 = vpop.f32.mrb[0].mxu0
    %v282 = vadd.f32 0.0, %v281
    %v283 = vpop.f32.mrb[0].mxu0
    %284 = vmatprep.mubr.bf16.mxu0 0
    %285 = vmatmul.mubr.bf16.gmra.mrb[0].mxu0 %v181
    %v286 = vpop.f32.mrb[0].mxu0
    %v287 = vadd.f32 0.0, %v286
    %v288 = vpop.f32.mrb[0].mxu0
    %v289 = vpop.f32.mrb[0].mxu0
    %v290 = vadd.f32 0.0, %v289
    %v291 = vpop.f32.mrb[0].mxu0
    %292 = vmatprep.mubr.bf16.mxu0 0
    %293 = vmatmul.mubr.bf16.gmra.mrb[0].mxu0 %v182
    %v294 = vpop.f32.mrb[0].mxu0
    %v295 = vadd.f32 0.0, %v294
    %v296 = vpop.f32.mrb[0].mxu0
    %v297 = vpop.f32.mrb[0].mxu0
    %v298 = vadd.f32 0.0, %v297
    %v299 = vpop.f32.mrb[0].mxu0
    %300 = vmatprep.mubr.bf16.mxu0 0
    %301 = vmatmul.mubr.bf16.gmra.mrb[0].mxu0 %v183
    %v302 = vpop.f32.mrb[0].mxu0
    %v303 = vadd.f32 0.0, %v302
    %v304 = vpop.f32.mrb[0].mxu0
    %v305 = vpop.f32.mrb[0].mxu0
    %v306 = vadd.f32 0.0, %v305
    %v307 = vpop.f32.mrb[0].mxu0
    %308 = vmatprep.mubr.bf16.mxu0 0
    %309 = vmatmul.mubr.bf16.gmra.mrb[0].mxu0 %v184
    %v310 = vpop.f32.mrb[0].mxu0
    %v311 = vadd.f32 0.0, %v310
    %v312 = vpop.f32.mrb[0].mxu0
    %v313 = vpop.f32.mrb[0].mxu0
    %v314 = vadd.f32 0.0, %v313
    %v315 = vpop.f32.mrb[0].mxu0
    %316 = vmatprep.mubr.bf16.mxu0 0
    %317 = vmatmul.mubr.bf16.gmra.mrb[0].mxu0 %v185
    %v318 = vpop.f32.mrb[0].mxu0
    %v319 = vadd.f32 0.0, %v318
    %v320 = vpop.f32.mrb[0].mxu0
    %v321 = vpop.f32.mrb[0].mxu0
    %v322 = vadd.f32 0.0, %v321
    %v323 = vpop.f32.mrb[0].mxu0
    %324 = vmatprep.mubr.bf16.mxu0 0
    %325 = vmatmul.mubr.bf16.gmra.mrb[0].mxu0 %v186
    %v326 = vpop.f32.mrb[0].mxu0
    %v327 = vadd.f32 0.0, %v326
    %v328 = vpop.f32.mrb[0].mxu0
    %v329 = vpop.f32.mrb[0].mxu0
    %v330 = vadd.f32 0.0, %v329
    %v331 = vpop.f32.mrb[0].mxu0
    %332 = vmatprep.mubr.bf16.mxu0 0
    %333 = vmatmul.mubr.bf16.gmra.mrb[0].mxu0 %v187
    %v334 = vpop.f32.mrb[0].mxu0
    %v335 = vadd.f32 0.0, %v334
    %v336 = vpop.f32.mrb[0].mxu0
    %v337 = vpop.f32.mrb[0].mxu0
    %v338 = vadd.f32 0.0, %v337
    %v339 = vpop.f32.mrb[0].mxu0
    %340 = vdwg.mxu0
    %v341 = vpack.c.bf16 %v282, %v279
    %v342 = vpack.c.bf16 %v290, %v287
    %v343 = vpack.c.bf16 %v298, %v295
    %v344 = vpack.c.bf16 %v306, %v303
    %v345 = vpack.c.bf16 %v314, %v311
    %v346 = vpack.c.bf16 %v322, %v319
    %v347 = vpack.c.bf16 %v330, %v327
    %v348 = vpack.c.bf16 %v338, %v335
    %v350 = vlaneseq
    %v351 = vshrl.u32 %v350, 7
    %v352 = vsub.s32 0, %v351
    %v353 = vrot.slane %v147, %v352
    %v371 = vunpack.c.l.b16 %v99
    %v372 = vunpack.c.l.b16 %v100
    %v373 = vunpack.c.l.b16 %v101
    %v374 = vunpack.c.l.b16 %v102
    %v375 = vunpack.c.l.b16 %v103
    %v376 = vunpack.c.l.b16 %v104
    %v377 = vunpack.c.l.b16 %v105
    %v378 = vunpack.c.l.b16 %v106
    %v379 = vunpack.c.l.b16 %v107
    %v380 = vunpack.c.l.b16 %v108
    %v381 = vunpack.c.l.b16 %v109
    %v382 = vunpack.c.l.b16 %v110
    %v383 = vunpack.c.l.b16 %v111
    %v384 = vunpack.c.l.b16 %v112
    %v385 = vunpack.c.l.b16 %v113
    %v386 = vunpack.c.l.b16 %v114
    %v387 = vpack.c.b16 %v372, %v371
    %v388 = vpack.c.b16 %v374, %v373
    %v389 = vpack.c.b16 %v376, %v375
    %v390 = vpack.c.b16 %v378, %v377
    %v391 = vpack.c.b16 %v380, %v379
    %v392 = vpack.c.b16 %v382, %v381
    %v393 = vpack.c.b16 %v384, %v383
    %v394 = vpack.c.b16 %v386, %v385
    %403 = vmatprep.subr.bf16.mxu0 0
    %404 = vmatpush1.bf16.msra.mxu0 %v341
    %405 = vmatprep.subr.bf16.mxu0 0
    %406 = vmatpush1.bf16.msra.mxu0 %v342
    %407 = vmatprep.subr.bf16.mxu0 0
    %408 = vmatpush1.bf16.msra.mxu0 %v343
    %409 = vmatprep.subr.bf16.mxu0 0
    %410 = vmatpush1.bf16.msra.mxu0 %v344
    %411 = vmatprep.subr.bf16.mxu0 0
    %412 = vmatpush1.bf16.msra.mxu0 %v345
    %413 = vmatprep.subr.bf16.mxu0 0
    %414 = vmatpush1.bf16.msra.mxu0 %v346
    %415 = vmatprep.subr.bf16.mxu0 0
    %416 = vmatpush1.bf16.msra.mxu0 %v347
    %417 = vmatprep.subr.bf16.mxu0 0
    %418 = vmatpush1.bf16.msra.mxu0 %v348
    %419 = vmatprep.subr.bf16.mxu0 0
    %420 = vmatpush1.bf16.msra.mxu0 0
    %421 = vmatprep.subr.bf16.mxu0 0
    %422 = vmatpush1.bf16.msra.mxu0 0
    %423 = vmatprep.subr.bf16.mxu0 0
    %424 = vmatpush1.bf16.msra.mxu0 0
    %425 = vmatprep.subr.bf16.mxu0 0
    %426 = vmatpush1.bf16.msra.mxu0 0
    %427 = vmatprep.subr.bf16.mxu0 0
    %428 = vmatpush1.bf16.msra.mxu0 0
    %429 = vmatprep.subr.bf16.mxu0 0
    %430 = vmatpush1.bf16.msra.mxu0 0
    %431 = vmatprep.subr.bf16.mxu0 0
    %432 = vmatpush1.bf16.msra.mxu0 0
    %433 = vmatprep.subr.bf16.mxu0 0
    %434 = vmatpush1.bf16.msra.mxu0 0
    %435 = vmatprep.mubr.bf16.mxu0 0
    %436 = vmatmul.mubr.bf16.gmra.mrb[0].mxu0 %v387
    %v437 = vpop.f32.mrb[0].mxu0
    %v438 = vadd.f32 %v353, %v437
    %v439 = vpop.f32.mrb[0].mxu0
    %v440 = vpop.f32.mrb[0].mxu0
    %v441 = vadd.f32 %v353, %v440
    %v442 = vpop.f32.mrb[0].mxu0
    %443 = vmatprep.mubr.bf16.mxu0 0
    %444 = vmatmul.mubr.bf16.gmra.mrb[0].mxu0 %v388
    %v445 = vpop.f32.mrb[0].mxu0
    %v446 = vadd.f32 %v353, %v445
    %v447 = vpop.f32.mrb[0].mxu0
    %v448 = vpop.f32.mrb[0].mxu0
    %v449 = vadd.f32 %v353, %v448
    %v450 = vpop.f32.mrb[0].mxu0
    %451 = vmatprep.mubr.bf16.mxu0 0
    %452 = vmatmul.mubr.bf16.gmra.mrb[0].mxu0 %v389
    %v453 = vpop.f32.mrb[0].mxu0
    %v454 = vadd.f32 %v353, %v453
    %v455 = vpop.f32.mrb[0].mxu0
    %v456 = vpop.f32.mrb[0].mxu0
    %v457 = vadd.f32 %v353, %v456
    %v458 = vpop.f32.mrb[0].mxu0
    %459 = vmatprep.mubr.bf16.mxu0 0
    %460 = vmatmul.mubr.bf16.gmra.mrb[0].mxu0 %v390
    %v461 = vpop.f32.mrb[0].mxu0
    %v462 = vadd.f32 %v353, %v461
    %v463 = vpop.f32.mrb[0].mxu0
    %v464 = vpop.f32.mrb[0].mxu0
    %v465 = vadd.f32 %v353, %v464
    %v466 = vpop.f32.mrb[0].mxu0
    %467 = vmatprep.mubr.bf16.mxu0 0
    %468 = vmatmul.mubr.bf16.gmra.mrb[0].mxu0 %v391
    %v469 = vpop.f32.mrb[0].mxu0
    %v470 = vadd.f32 %v353, %v469
    %v471 = vpop.f32.mrb[0].mxu0
    %v472 = vpop.f32.mrb[0].mxu0
    %v473 = vadd.f32 %v353, %v472
    %v474 = vpop.f32.mrb[0].mxu0
    %475 = vmatprep.mubr.bf16.mxu0 0
    %476 = vmatmul.mubr.bf16.gmra.mrb[0].mxu0 %v392
    %v477 = vpop.f32.mrb[0].mxu0
    %v478 = vadd.f32 %v353, %v477
    %v479 = vpop.f32.mrb[0].mxu0
    %v480 = vpop.f32.mrb[0].mxu0
    %v481 = vadd.f32 %v353, %v480
    %v482 = vpop.f32.mrb[0].mxu0
    %483 = vmatprep.mubr.bf16.mxu0 0
    %484 = vmatmul.mubr.bf16.gmra.mrb[0].mxu0 %v393
    %v485 = vpop.f32.mrb[0].mxu0
    %v486 = vadd.f32 %v353, %v485
    %v487 = vpop.f32.mrb[0].mxu0
    %v488 = vpop.f32.mrb[0].mxu0
    %v489 = vadd.f32 %v353, %v488
    %v490 = vpop.f32.mrb[0].mxu0
    %491 = vmatprep.mubr.bf16.mxu0 0
    %492 = vmatmul.mubr.bf16.gmra.mrb[0].mxu0 %v394
    %v493 = vpop.f32.mrb[0].mxu0
    %v494 = vadd.f32 %v353, %v493
    %v495 = vpop.f32.mrb[0].mxu0
    %v496 = vpop.f32.mrb[0].mxu0
    %v497 = vadd.f32 %v353, %v496
    %v498 = vpop.f32.mrb[0].mxu0
    %499 = vdwg.mxu0
    %v500 = vmax.f32 %v438, 0.0
    %v501 = vmax.f32 %v441, 0.0
    %v502 = vmax.f32 %v446, 0.0
    %v503 = vmax.f32 %v449, 0.0
    %v504 = vmax.f32 %v454, 0.0
    %v505 = vmax.f32 %v457, 0.0
    %v506 = vmax.f32 %v462, 0.0
    %v507 = vmax.f32 %v465, 0.0
    %v508 = vmax.f32 %v470, 0.0
    %v509 = vmax.f32 %v473, 0.0
    %v510 = vmax.f32 %v478, 0.0
    %v511 = vmax.f32 %v481, 0.0
    %v512 = vmax.f32 %v486, 0.0
    %v513 = vmax.f32 %v489, 0.0
    %v514 = vmax.f32 %v494, 0.0
    %v515 = vmax.f32 %v497, 0.0
    %v516 = vpack.c.bf16 %v501, %v500
    %v517 = vpack.c.bf16 %v503, %v502
    %v518 = vpack.c.bf16 %v505, %v504
    %v519 = vpack.c.bf16 %v507, %v506
    %v520 = vpack.c.bf16 %v509, %v508
    %v521 = vpack.c.bf16 %v511, %v510
    %v522 = vpack.c.bf16 %v513, %v512
    %v523 = vpack.c.bf16 %v515, %v514
    %v524 = vld [vmem:[#allocation8] sm:$0xf]
    %v525 = vld [vmem:[#allocation8 + $0x4] sm:$0xf]
    %v526 = vld [vmem:[#allocation8 + $0x8] sm:$0xf]
    %v527 = vld [vmem:[#allocation8 + $0xc] sm:$0xf]
    %v528 = vld [vmem:[#allocation8 + $0x10] sm:$0xf]
    %v529 = vld [vmem:[#allocation8 + $0x14] sm:$0xf]
    %v530 = vld [vmem:[#allocation8 + $0x18] sm:$0xf]
    %v531 = vld [vmem:[#allocation8 + $0x1c] sm:$0xf]
    %v532 = vld [vmem:[#allocation8 + $0x20] sm:$0xf]
    %v533 = vld [vmem:[#allocation8 + $0x24] sm:$0xf]
    %v534 = vld [vmem:[#allocation8 + $0x28] sm:$0xf]
    %v535 = vld [vmem:[#allocation8 + $0x2c] sm:$0xf]
    %v536 = vld [vmem:[#allocation8 + $0x30] sm:$0xf]
    %v537 = vld [vmem:[#allocation8 + $0x34] sm:$0xf]
    %v538 = vld [vmem:[#allocation8 + $0x38] sm:$0xf]
    %v539 = vld [vmem:[#allocation8 + $0x3c] sm:$0xf]
    %v540 = vld [vmem:[%s5] sm:$0x1]
    %v557 = vunpack.c.l.b16 %v524
    %v558 = vunpack.c.l.b16 %v525
    %v559 = vunpack.c.l.b16 %v526
    %v560 = vunpack.c.l.b16 %v527
    %v561 = vunpack.c.l.b16 %v528
    %v562 = vunpack.c.l.b16 %v529
    %v563 = vunpack.c.l.b16 %v530
    %v564 = vunpack.c.l.b16 %v531
    %v565 = vunpack.c.l.b16 %v532
    %v566 = vunpack.c.l.b16 %v533
    %v567 = vunpack.c.l.b16 %v534
    %v568 = vunpack.c.l.b16 %v535
    %v569 = vunpack.c.l.b16 %v536
    %v570 = vunpack.c.l.b16 %v537
    %v571 = vunpack.c.l.b16 %v538
    %v572 = vunpack.c.l.b16 %v539
    %v573 = vpack.c.b16 %v558, %v557
    %v574 = vpack.c.b16 %v560, %v559
    %v575 = vpack.c.b16 %v562, %v561
    %v576 = vpack.c.b16 %v564, %v563
    %v577 = vpack.c.b16 %v566, %v565
    %v578 = vpack.c.b16 %v568, %v567
    %v579 = vpack.c.b16 %v570, %v569
    %v580 = vpack.c.b16 %v572, %v571
    %589 = vmatprep.subr.bf16.mxu0 0
    %590 = vmatpush1.bf16.msra.mxu0 %v573
    %591 = vmatprep.subr.bf16.mxu0 0
    %592 = vmatpush1.bf16.msra.mxu0 %v574
    %593 = vmatprep.subr.bf16.mxu0 0
    %594 = vmatpush1.bf16.msra.mxu0 %v575
    %595 = vmatprep.subr.bf16.mxu0 0
    %596 = vmatpush1.bf16.msra.mxu0 %v576
    %597 = vmatprep.subr.bf16.mxu0 0
    %598 = vmatpush1.bf16.msra.mxu0 %v577
    %599 = vmatprep.subr.bf16.mxu0 0
    %600 = vmatpush1.bf16.msra.mxu0 %v578
    %601 = vmatprep.subr.bf16.mxu0 0
    %602 = vmatpush1.bf16.msra.mxu0 %v579
    %603 = vmatprep.subr.bf16.mxu0 0
    %604 = vmatpush1.bf16.msra.mxu0 %v580
    %605 = vmatprep.subr.bf16.mxu0 0
    %606 = vmatpush1.bf16.msra.mxu0 0
    %607 = vmatprep.subr.bf16.mxu0 0
    %608 = vmatpush1.bf16.msra.mxu0 0
    %609 = vmatprep.subr.bf16.mxu0 0
    %610 = vmatpush1.bf16.msra.mxu0 0
    %611 = vmatprep.subr.bf16.mxu0 0
    %612 = vmatpush1.bf16.msra.mxu0 0
    %613 = vmatprep.subr.bf16.mxu0 0
    %614 = vmatpush1.bf16.msra.mxu0 0
    %615 = vmatprep.subr.bf16.mxu0 0
    %616 = vmatpush1.bf16.msra.mxu0 0
    %617 = vmatprep.subr.bf16.mxu0 0
    %618 = vmatpush1.bf16.msra.mxu0 0
    %619 = vmatprep.subr.bf16.mxu0 0
    %620 = vmatpush1.bf16.msra.mxu0 0
    %621 = vmatprep.mubr.bf16.mxu0 0
    %622 = vmatmul.mubr.bf16.gmra.mrb[0].mxu0 %v516
    %v623 = vpop.f32.mrb[0].mxu0
    %v624 = vadd.f32 0.0, %v623
    %v625 = vpop.f32.mrb[0].mxu0
    %v626 = vpop.f32.mrb[0].mxu0
    %v627 = vadd.f32 0.0, %v626
    %v628 = vpop.f32.mrb[0].mxu0
    %629 = vmatprep.mubr.bf16.mxu0 0
    %630 = vmatmul.mubr.bf16.gmra.mrb[0].mxu0 %v517
    %v631 = vpop.f32.mrb[0].mxu0
    %v632 = vadd.f32 0.0, %v631
    %v633 = vpop.f32.mrb[0].mxu0
    %v634 = vpop.f32.mrb[0].mxu0
    %v635 = vadd.f32 0.0, %v634
    %v636 = vpop.f32.mrb[0].mxu0
    %637 = vmatprep.mubr.bf16.mxu0 0
    %638 = vmatmul.mubr.bf16.gmra.mrb[0].mxu0 %v518
    %v639 = vpop.f32.mrb[0].mxu0
    %v640 = vadd.f32 0.0, %v639
    %v641 = vpop.f32.mrb[0].mxu0
    %v642 = vpop.f32.mrb[0].mxu0
    %v643 = vadd.f32 0.0, %v642
    %v644 = vpop.f32.mrb[0].mxu0
    %645 = vmatprep.mubr.bf16.mxu0 0
    %646 = vmatmul.mubr.bf16.gmra.mrb[0].mxu0 %v519
    %v647 = vpop.f32.mrb[0].mxu0
    %v648 = vadd.f32 0.0, %v647
    %v649 = vpop.f32.mrb[0].mxu0
    %v650 = vpop.f32.mrb[0].mxu0
    %v651 = vadd.f32 0.0, %v650
    %v652 = vpop.f32.mrb[0].mxu0
    %653 = vmatprep.mubr.bf16.mxu0 0
    %654 = vmatmul.mubr.bf16.gmra.mrb[0].mxu0 %v520
    %v655 = vpop.f32.mrb[0].mxu0
    %v656 = vadd.f32 0.0, %v655
    %v657 = vpop.f32.mrb[0].mxu0
    %v658 = vpop.f32.mrb[0].mxu0
    %v659 = vadd.f32 0.0, %v658
    %v660 = vpop.f32.mrb[0].mxu0
    %661 = vmatprep.mubr.bf16.mxu0 0
    %662 = vmatmul.mubr.bf16.gmra.mrb[0].mxu0 %v521
    %v663 = vpop.f32.mrb[0].mxu0
    %v664 = vadd.f32 0.0, %v663
    %v665 = vpop.f32.mrb[0].mxu0
    %v666 = vpop.f32.mrb[0].mxu0
    %v667 = vadd.f32 0.0, %v666
    %v668 = vpop.f32.mrb[0].mxu0
    %669 = vmatprep.mubr.bf16.mxu0 0
    %670 = vmatmul.mubr.bf16.gmra.mrb[0].mxu0 %v522
    %v671 = vpop.f32.mrb[0].mxu0
    %v672 = vadd.f32 0.0, %v671
    %v673 = vpop.f32.mrb[0].mxu0
    %v674 = vpop.f32.mrb[0].mxu0
    %v675 = vadd.f32 0.0, %v674
    %v676 = vpop.f32.mrb[0].mxu0
    %677 = vmatprep.mubr.bf16.mxu0 0
    %678 = vmatmul.mubr.bf16.gmra.mrb[0].mxu0 %v523
    %v679 = vpop.f32.mrb[0].mxu0
    %v680 = vadd.f32 0.0, %v679
    %v681 = vpop.f32.mrb[0].mxu0
    %v682 = vpop.f32.mrb[0].mxu0
    %v683 = vadd.f32 0.0, %v682
    %v684 = vpop.f32.mrb[0].mxu0
    %685 = vdwg.mxu0
    %v686 = vpack.c.bf16 %v627, %v624
    %v687 = vpack.c.bf16 %v635, %v632
    %v688 = vpack.c.bf16 %v643, %v640
    %v689 = vpack.c.bf16 %v651, %v648
    %v690 = vpack.c.bf16 %v659, %v656
    %v691 = vpack.c.bf16 %v667, %v664
    %v692 = vpack.c.bf16 %v675, %v672
    %v693 = vpack.c.bf16 %v683, %v680
    %v695 = vlaneseq
    %v696 = vshrl.u32 %v695, 7
    %v697 = vsub.s32 0, %v696
    %v698 = vrot.slane %v540, %v697
    %700 = vmatprep.subr.bf16.mxu0 0
    %701 = vmatpush1.bf16.msra.mxu0 %v686
    %702 = vmatprep.subr.bf16.mxu0 0
    %703 = vmatpush1.bf16.msra.mxu0 %v687
    %704 = vmatprep.subr.bf16.mxu0 0
    %705 = vmatpush1.bf16.msra.mxu0 %v688
    %706 = vmatprep.subr.bf16.mxu0 0
    %707 = vmatpush1.bf16.msra.mxu0 %v689
    %708 = vmatprep.subr.bf16.mxu0 0
    %709 = vmatpush1.bf16.msra.mxu0 %v690
    %710 = vmatprep.subr.bf16.mxu0 0
    %711 = vmatpush1.bf16.msra.mxu0 %v691
    %712 = vmatprep.subr.bf16.mxu0 0
    %713 = vmatpush1.bf16.msra.mxu0 %v692
    %714 = vmatprep.subr.bf16.mxu0 0
    %715 = vmatpush1.bf16.msra.mxu0 %v693
    %716 = vmatprep.subr.bf16.mxu0 0
    %717 = vmatpush1.bf16.msra.mxu0 0
    %718 = vmatprep.subr.bf16.mxu0 0
    %719 = vmatpush1.bf16.msra.mxu0 0
    %720 = vmatprep.subr.bf16.mxu0 0
    %721 = vmatpush1.bf16.msra.mxu0 0
    %722 = vmatprep.subr.bf16.mxu0 0
    %723 = vmatpush1.bf16.msra.mxu0 0
    %724 = vmatprep.subr.bf16.mxu0 0
    %725 = vmatpush1.bf16.msra.mxu0 0
    %726 = vmatprep.subr.bf16.mxu0 0
    %727 = vmatpush1.bf16.msra.mxu0 0
    %728 = vmatprep.subr.bf16.mxu0 0
    %729 = vmatpush1.bf16.msra.mxu0 0
    %730 = vmatprep.subr.bf16.mxu0 0
    %731 = vmatpush1.bf16.msra.mxu0 0
    %732 = vmatprep.mubr.bf16.mxu0 0
    %733 = vmatmul.mubr.bf16.gmra.mrb[0].mxu0 %v387
    %v734 = vpop.f32.mrb[0].mxu0
    %v735 = vadd.f32 %v698, %v734
    %v736 = vpop.f32.mrb[0].mxu0
    %v737 = vpop.f32.mrb[0].mxu0
    %v738 = vadd.f32 %v698, %v737
    %v739 = vpop.f32.mrb[0].mxu0
    %740 = vmatprep.mubr.bf16.mxu0 0
    %741 = vmatmul.mubr.bf16.gmra.mrb[0].mxu0 %v388
    %v742 = vpop.f32.mrb[0].mxu0
    %v743 = vadd.f32 %v698, %v742
    %v744 = vpop.f32.mrb[0].mxu0
    %v745 = vpop.f32.mrb[0].mxu0
    %v746 = vadd.f32 %v698, %v745
    %v747 = vpop.f32.mrb[0].mxu0
    %748 = vmatprep.mubr.bf16.mxu0 0
    %749 = vmatmul.mubr.bf16.gmra.mrb[0].mxu0 %v389
    %v750 = vpop.f32.mrb[0].mxu0
    %v751 = vadd.f32 %v698, %v750
    %v752 = vpop.f32.mrb[0].mxu0
    %v753 = vpop.f32.mrb[0].mxu0
    %v754 = vadd.f32 %v698, %v753
    %v755 = vpop.f32.mrb[0].mxu0
    %756 = vmatprep.mubr.bf16.mxu0 0
    %757 = vmatmul.mubr.bf16.gmra.mrb[0].mxu0 %v390
    %v758 = vpop.f32.mrb[0].mxu0
    %v759 = vadd.f32 %v698, %v758
    %v760 = vpop.f32.mrb[0].mxu0
    %v761 = vpop.f32.mrb[0].mxu0
    %v762 = vadd.f32 %v698, %v761
    %v763 = vpop.f32.mrb[0].mxu0
    %764 = vmatprep.mubr.bf16.mxu0 0
    %765 = vmatmul.mubr.bf16.gmra.mrb[0].mxu0 %v391
    %v766 = vpop.f32.mrb[0].mxu0
    %v767 = vadd.f32 %v698, %v766
    %v768 = vpop.f32.mrb[0].mxu0
    %v769 = vpop.f32.mrb[0].mxu0
    %v770 = vadd.f32 %v698, %v769
    %v771 = vpop.f32.mrb[0].mxu0
    %772 = vmatprep.mubr.bf16.mxu0 0
    %773 = vmatmul.mubr.bf16.gmra.mrb[0].mxu0 %v392
    %v774 = vpop.f32.mrb[0].mxu0
    %v775 = vadd.f32 %v698, %v774
    %v776 = vpop.f32.mrb[0].mxu0
    %v777 = vpop.f32.mrb[0].mxu0
    %v778 = vadd.f32 %v698, %v777
    %v779 = vpop.f32.mrb[0].mxu0
    %780 = vmatprep.mubr.bf16.mxu0 0
    %781 = vmatmul.mubr.bf16.gmra.mrb[0].mxu0 %v393
    %v782 = vpop.f32.mrb[0].mxu0
    %v783 = vadd.f32 %v698, %v782
    %v784 = vpop.f32.mrb[0].mxu0
    %v785 = vpop.f32.mrb[0].mxu0
    %v786 = vadd.f32 %v698, %v785
    %v787 = vpop.f32.mrb[0].mxu0
    %788 = vmatprep.mubr.bf16.mxu0 0
    %789 = vmatmul.mubr.bf16.gmra.mrb[0].mxu0 %v394
    %v790 = vpop.f32.mrb[0].mxu0
    %v791 = vadd.f32 %v698, %v790
    %v792 = vpop.f32.mrb[0].mxu0
    %v793 = vpop.f32.mrb[0].mxu0
    %v794 = vadd.f32 %v698, %v793
    %v795 = vpop.f32.mrb[0].mxu0
    %796 = vdwg.mxu0
    %v797 = vmax.f32 %v735, 0.0
    %v798 = vmax.f32 %v738, 0.0
    %v799 = vmax.f32 %v743, 0.0
    %v800 = vmax.f32 %v746, 0.0
    %v801 = vmax.f32 %v751, 0.0
    %v802 = vmax.f32 %v754, 0.0
    %v803 = vmax.f32 %v759, 0.0
    %v804 = vmax.f32 %v762, 0.0
    %v805 = vmax.f32 %v767, 0.0
    %v806 = vmax.f32 %v770, 0.0
    %v807 = vmax.f32 %v775, 0.0
    %v808 = vmax.f32 %v778, 0.0
    %v809 = vmax.f32 %v783, 0.0
    %v810 = vmax.f32 %v786, 0.0
    %v811 = vmax.f32 %v791, 0.0
    %v812 = vmax.f32 %v794, 0.0
    %v813 = vpack.c.bf16 %v798, %v797
    %v814 = vpack.c.bf16 %v800, %v799
    %v815 = vpack.c.bf16 %v802, %v801
    %v816 = vpack.c.bf16 %v804, %v803
    %v817 = vpack.c.bf16 %v806, %v805
    %v818 = vpack.c.bf16 %v808, %v807
    %v819 = vpack.c.bf16 %v810, %v809
    %v820 = vpack.c.bf16 %v812, %v811
    %v821 = vld [vmem:[#allocation10] sm:$0xf]
    %v822 = vld [vmem:[#allocation10 + $0x4] sm:$0xf]
    %v823 = vld [vmem:[#allocation10 + $0x8] sm:$0xf]
    %v824 = vld [vmem:[#allocation10 + $0xc] sm:$0xf]
    %v825 = vld [vmem:[#allocation10 + $0x10] sm:$0xf]
    %v826 = vld [vmem:[#allocation10 + $0x14] sm:$0xf]
    %v827 = vld [vmem:[#allocation10 + $0x18] sm:$0xf]
    %v828 = vld [vmem:[#allocation10 + $0x1c] sm:$0xf]
    %v829 = vld [vmem:[#allocation10 + $0x20] sm:$0xf]
    %v830 = vld [vmem:[#allocation10 + $0x24] sm:$0xf]
    %v831 = vld [vmem:[#allocation10 + $0x28] sm:$0xf]
    %v832 = vld [vmem:[#allocation10 + $0x2c] sm:$0xf]
    %v833 = vld [vmem:[#allocation10 + $0x30] sm:$0xf]
    %v834 = vld [vmem:[#allocation10 + $0x34] sm:$0xf]
    %v835 = vld [vmem:[#allocation10 + $0x38] sm:$0xf]
    %v836 = vld [vmem:[#allocation10 + $0x3c] sm:$0xf]
    %v837 = vld [vmem:[%s7] sm:$0x1]
    %v854 = vunpack.c.l.b16 %v821
    %v855 = vunpack.c.l.b16 %v822
    %v856 = vunpack.c.l.b16 %v823
    %v857 = vunpack.c.l.b16 %v824
    %v858 = vunpack.c.l.b16 %v825
    %v859 = vunpack.c.l.b16 %v826
    %v860 = vunpack.c.l.b16 %v827
    %v861 = vunpack.c.l.b16 %v828
    %v862 = vunpack.c.l.b16 %v829
    %v863 = vunpack.c.l.b16 %v830
    %v864 = vunpack.c.l.b16 %v831
    %v865 = vunpack.c.l.b16 %v832
    %v866 = vunpack.c.l.b16 %v833
    %v867 = vunpack.c.l.b16 %v834
    %v868 = vunpack.c.l.b16 %v835
    %v869 = vunpack.c.l.b16 %v836
    %v870 = vpack.c.b16 %v855, %v854
    %v871 = vpack.c.b16 %v857, %v856
    %v872 = vpack.c.b16 %v859, %v858
    %v873 = vpack.c.b16 %v861, %v860
    %v874 = vpack.c.b16 %v863, %v862
    %v875 = vpack.c.b16 %v865, %v864
    %v876 = vpack.c.b16 %v867, %v866
    %v877 = vpack.c.b16 %v869, %v868
    %886 = vmatprep.subr.bf16.mxu0 0
    %887 = vmatpush1.bf16.msra.mxu0 %v870
    %888 = vmatprep.subr.bf16.mxu0 0
    %889 = vmatpush1.bf16.msra.mxu0 %v871
    %890 = vmatprep.subr.bf16.mxu0 0
    %891 = vmatpush1.bf16.msra.mxu0 %v872
    %892 = vmatprep.subr.bf16.mxu0 0
    %893 = vmatpush1.bf16.msra.mxu0 %v873
    %894 = vmatprep.subr.bf16.mxu0 0
    %895 = vmatpush1.bf16.msra.mxu0 %v874
    %896 = vmatprep.subr.bf16.mxu0 0
    %897 = vmatpush1.bf16.msra.mxu0 %v875
    %898 = vmatprep.subr.bf16.mxu0 0
    %899 = vmatpush1.bf16.msra.mxu0 %v876
    %900 = vmatprep.subr.bf16.mxu0 0
    %901 = vmatpush1.bf16.msra.mxu0 %v877
    %902 = vmatprep.subr.bf16.mxu0 0
    %903 = vmatpush1.bf16.msra.mxu0 0
    %904 = vmatprep.subr.bf16.mxu0 0
    %905 = vmatpush1.bf16.msra.mxu0 0
    %906 = vmatprep.subr.bf16.mxu0 0
    %907 = vmatpush1.bf16.msra.mxu0 0
    %908 = vmatprep.subr.bf16.mxu0 0
    %909 = vmatpush1.bf16.msra.mxu0 0
    %910 = vmatprep.subr.bf16.mxu0 0
    %911 = vmatpush1.bf16.msra.mxu0 0
    %912 = vmatprep.subr.bf16.mxu0 0
    %913 = vmatpush1.bf16.msra.mxu0 0
    %914 = vmatprep.subr.bf16.mxu0 0
    %915 = vmatpush1.bf16.msra.mxu0 0
    %916 = vmatprep.subr.bf16.mxu0 0
    %917 = vmatpush1.bf16.msra.mxu0 0
    %918 = vmatprep.mubr.bf16.mxu0 0
    %919 = vmatmul.mubr.bf16.gmra.mrb[0].mxu0 %v813
    %v920 = vpop.f32.mrb[0].mxu0
    %v921 = vadd.f32 0.0, %v920
    %v922 = vpop.f32.mrb[0].mxu0
    %v923 = vpop.f32.mrb[0].mxu0
    %v924 = vadd.f32 0.0, %v923
    %v925 = vpop.f32.mrb[0].mxu0
    %926 = vmatprep.mubr.bf16.mxu0 0
    %927 = vmatmul.mubr.bf16.gmra.mrb[0].mxu0 %v814
    %v928 = vpop.f32.mrb[0].mxu0
    %v929 = vadd.f32 0.0, %v928
    %v930 = vpop.f32.mrb[0].mxu0
    %v931 = vpop.f32.mrb[0].mxu0
    %v932 = vadd.f32 0.0, %v931
    %v933 = vpop.f32.mrb[0].mxu0
    %934 = vmatprep.mubr.bf16.mxu0 0
    %935 = vmatmul.mubr.bf16.gmra.mrb[0].mxu0 %v815
    %v936 = vpop.f32.mrb[0].mxu0
    %v937 = vadd.f32 0.0, %v936
    %v938 = vpop.f32.mrb[0].mxu0
    %v939 = vpop.f32.mrb[0].mxu0
    %v940 = vadd.f32 0.0, %v939
    %v941 = vpop.f32.mrb[0].mxu0
    %942 = vmatprep.mubr.bf16.mxu0 0
    %943 = vmatmul.mubr.bf16.gmra.mrb[0].mxu0 %v816
    %v944 = vpop.f32.mrb[0].mxu0
    %v945 = vadd.f32 0.0, %v944
    %v946 = vpop.f32.mrb[0].mxu0
    %v947 = vpop.f32.mrb[0].mxu0
    %v948 = vadd.f32 0.0, %v947
    %v949 = vpop.f32.mrb[0].mxu0
    %950 = vmatprep.mubr.bf16.mxu0 0
    %951 = vmatmul.mubr.bf16.gmra.mrb[0].mxu0 %v817
    %v952 = vpop.f32.mrb[0].mxu0
    %v953 = vadd.f32 0.0, %v952
    %v954 = vpop.f32.mrb[0].mxu0
    %v955 = vpop.f32.mrb[0].mxu0
    %v956 = vadd.f32 0.0, %v955
    %v957 = vpop.f32.mrb[0].mxu0
    %958 = vmatprep.mubr.bf16.mxu0 0
    %959 = vmatmul.mubr.bf16.gmra.mrb[0].mxu0 %v818
    %v960 = vpop.f32.mrb[0].mxu0
    %v961 = vadd.f32 0.0, %v960
    %v962 = vpop.f32.mrb[0].mxu0
    %v963 = vpop.f32.mrb[0].mxu0
    %v964 = vadd.f32 0.0, %v963
    %v965 = vpop.f32.mrb[0].mxu0
    %966 = vmatprep.mubr.bf16.mxu0 0
    %967 = vmatmul.mubr.bf16.gmra.mrb[0].mxu0 %v819
    %v968 = vpop.f32.mrb[0].mxu0
    %v969 = vadd.f32 0.0, %v968
    %v970 = vpop.f32.mrb[0].mxu0
    %v971 = vpop.f32.mrb[0].mxu0
    %v972 = vadd.f32 0.0, %v971
    %v973 = vpop.f32.mrb[0].mxu0
    %974 = vmatprep.mubr.bf16.mxu0 0
    %975 = vmatmul.mubr.bf16.gmra.mrb[0].mxu0 %v820
    %v976 = vpop.f32.mrb[0].mxu0
    %v977 = vadd.f32 0.0, %v976
    %v978 = vpop.f32.mrb[0].mxu0
    %v979 = vpop.f32.mrb[0].mxu0
    %v980 = vadd.f32 0.0, %v979
    %v981 = vpop.f32.mrb[0].mxu0
    %982 = vdwg.mxu0
    %v983 = vpack.c.bf16 %v924, %v921
    %v984 = vpack.c.bf16 %v932, %v929
    %v985 = vpack.c.bf16 %v940, %v937
    %v986 = vpack.c.bf16 %v948, %v945
    %v987 = vpack.c.bf16 %v956, %v953
    %v988 = vpack.c.bf16 %v964, %v961
    %v989 = vpack.c.bf16 %v972, %v969
    %v990 = vpack.c.bf16 %v980, %v977
    %v992 = vlaneseq
    %v993 = vshrl.u32 %v992, 7
    %v994 = vsub.s32 0, %v993
    %v995 = vrot.slane %v837, %v994
    %997 = vmatprep.subr.bf16.mxu0 0
    %998 = vmatpush1.bf16.msra.mxu0 %v983
    %999 = vmatprep.subr.bf16.mxu0 0
    %1000 = vmatpush1.bf16.msra.mxu0 %v984
    %1001 = vmatprep.subr.bf16.mxu0 0
    %1002 = vmatpush1.bf16.msra.mxu0 %v985
    %1003 = vmatprep.subr.bf16.mxu0 0
    %1004 = vmatpush1.bf16.msra.mxu0 %v986
    %1005 = vmatprep.subr.bf16.mxu0 0
    %1006 = vmatpush1.bf16.msra.mxu0 %v987
    %1007 = vmatprep.subr.bf16.mxu0 0
    %1008 = vmatpush1.bf16.msra.mxu0 %v988
    %1009 = vmatprep.subr.bf16.mxu0 0
    %1010 = vmatpush1.bf16.msra.mxu0 %v989
    %1011 = vmatprep.subr.bf16.mxu0 0
    %1012 = vmatpush1.bf16.msra.mxu0 %v990
    %1013 = vmatprep.subr.bf16.mxu0 0
    %1014 = vmatpush1.bf16.msra.mxu0 0
    %1015 = vmatprep.subr.bf16.mxu0 0
    %1016 = vmatpush1.bf16.msra.mxu0 0
    %1017 = vmatprep.subr.bf16.mxu0 0
    %1018 = vmatpush1.bf16.msra.mxu0 0
    %1019 = vmatprep.subr.bf16.mxu0 0
    %1020 = vmatpush1.bf16.msra.mxu0 0
    %1021 = vmatprep.subr.bf16.mxu0 0
    %1022 = vmatpush1.bf16.msra.mxu0 0
    %1023 = vmatprep.subr.bf16.mxu0 0
    %1024 = vmatpush1.bf16.msra.mxu0 0
    %1025 = vmatprep.subr.bf16.mxu0 0
    %1026 = vmatpush1.bf16.msra.mxu0 0
    %1027 = vmatprep.subr.bf16.mxu0 0
    %1028 = vmatpush1.bf16.msra.mxu0 0
    %1029 = vmatprep.mubr.bf16.mxu0 0
    %1030 = vmatmul.mubr.bf16.gmra.mrb[0].mxu0 %v387
    %v1031 = vpop.f32.mrb[0].mxu0
    %v1032 = vadd.f32 %v995, %v1031
    %v1033 = vpop.f32.mrb[0].mxu0
    %v1034 = vpop.f32.mrb[0].mxu0
    %v1035 = vadd.f32 %v995, %v1034
    %v1036 = vpop.f32.mrb[0].mxu0
    %1037 = vmatprep.mubr.bf16.mxu0 0
    %1038 = vmatmul.mubr.bf16.gmra.mrb[0].mxu0 %v388
    %v1039 = vpop.f32.mrb[0].mxu0
    %v1040 = vadd.f32 %v995, %v1039
    %v1041 = vpop.f32.mrb[0].mxu0
    %v1042 = vpop.f32.mrb[0].mxu0
    %v1043 = vadd.f32 %v995, %v1042
    %v1044 = vpop.f32.mrb[0].mxu0
    %1045 = vmatprep.mubr.bf16.mxu0 0
    %1046 = vmatmul.mubr.bf16.gmra.mrb[0].mxu0 %v389
    %v1047 = vpop.f32.mrb[0].mxu0
    %v1048 = vadd.f32 %v995, %v1047
    %v1049 = vpop.f32.mrb[0].mxu0
    %v1050 = vpop.f32.mrb[0].mxu0
    %v1051 = vadd.f32 %v995, %v1050
    %v1052 = vpop.f32.mrb[0].mxu0
    %1053 = vmatprep.mubr.bf16.mxu0 0
    %1054 = vmatmul.mubr.bf16.gmra.mrb[0].mxu0 %v390
    %v1055 = vpop.f32.mrb[0].mxu0
    %v1056 = vadd.f32 %v995, %v1055
    %v1057 = vpop.f32.mrb[0].mxu0
    %v1058 = vpop.f32.mrb[0].mxu0
    %v1059 = vadd.f32 %v995, %v1058
    %v1060 = vpop.f32.mrb[0].mxu0
    %1061 = vmatprep.mubr.bf16.mxu0 0
    %1062 = vmatmul.mubr.bf16.gmra.mrb[0].mxu0 %v391
    %v1063 = vpop.f32.mrb[0].mxu0
    %v1064 = vadd.f32 %v995, %v1063
    %v1065 = vpop.f32.mrb[0].mxu0
    %v1066 = vpop.f32.mrb[0].mxu0
    %v1067 = vadd.f32 %v995, %v1066
    %v1068 = vpop.f32.mrb[0].mxu0
    %1069 = vmatprep.mubr.bf16.mxu0 0
    %1070 = vmatmul.mubr.bf16.gmra.mrb[0].mxu0 %v392
    %v1071 = vpop.f32.mrb[0].mxu0
    %v1072 = vadd.f32 %v995, %v1071
    %v1073 = vpop.f32.mrb[0].mxu0
    %v1074 = vpop.f32.mrb[0].mxu0
    %v1075 = vadd.f32 %v995, %v1074
    %v1076 = vpop.f32.mrb[0].mxu0
    %1077 = vmatprep.mubr.bf16.mxu0 0
    %1078 = vmatmul.mubr.bf16.gmra.mrb[0].mxu0 %v393
    %v1079 = vpop.f32.mrb[0].mxu0
    %v1080 = vadd.f32 %v995, %v1079
    %v1081 = vpop.f32.mrb[0].mxu0
    %v1082 = vpop.f32.mrb[0].mxu0
    %v1083 = vadd.f32 %v995, %v1082
    %v1084 = vpop.f32.mrb[0].mxu0
    %1085 = vmatprep.mubr.bf16.mxu0 0
    %1086 = vmatmul.mubr.bf16.gmra.mrb[0].mxu0 %v394
    %v1087 = vpop.f32.mrb[0].mxu0
    %v1088 = vadd.f32 %v995, %v1087
    %v1089 = vpop.f32.mrb[0].mxu0
    %v1090 = vpop.f32.mrb[0].mxu0
    %v1091 = vadd.f32 %v995, %v1090
    %v1092 = vpop.f32.mrb[0].mxu0
    %1093 = vdwg.mxu0
    %1094 = vst [vmem:[#allocation11] sm:$0xff] %v1032
    %1095 = vst [vmem:[#allocation11 + $0x8] sm:$0xff] %v1035
    %1096 = vst [vmem:[#allocation11 + $0x10] sm:$0xff] %v1040
    %1097 = vst [vmem:[#allocation11 + $0x18] sm:$0xff] %v1043
    %1098 = vst [vmem:[#allocation11 + $0x20] sm:$0xff] %v1048
    %1099 = vst [vmem:[#allocation11 + $0x28] sm:$0xff] %v1051
    %1100 = vst [vmem:[#allocation11 + $0x30] sm:$0xff] %v1056
    %1101 = vst [vmem:[#allocation11 + $0x38] sm:$0xff] %v1059
    %1102 = vst [vmem:[#allocation11 + $0x40] sm:$0xff] %v1064
    %1103 = vst [vmem:[#allocation11 + $0x48] sm:$0xff] %v1067
    %1104 = vst [vmem:[#allocation11 + $0x50] sm:$0xff] %v1072
    %1105 = vst [vmem:[#allocation11 + $0x58] sm:$0xff] %v1075
    %1106 = vst [vmem:[#allocation11 + $0x60] sm:$0xff] %v1080
    %1107 = vst [vmem:[#allocation11 + $0x68] sm:$0xff] %v1083
    %1108 = vst [vmem:[#allocation11 + $0x70] sm:$0xff] %v1088
    %1109 = vst [vmem:[#allocation11 + $0x78] sm:$0xff] %v1091
    // Predicated region
    $region54: #{tpu_custom_call.1} parent=1 // pred_check
      _
    $region55: #{tpu_custom_call.1} parent=1 // pred_check_branch
      %1111 = sbr.rel (0) target = $region57
    $region56: #{tpu_custom_call.1} parent=1 // pred_region
      %s1113 = ssub.s32 2048, 2048
      %1114 = vsyncadd [#allocation4], %s1113
      %s1115 = sshll.u32 [#allocation11], 4
      %s1116 = int_to_ptr.vmem [resolvable:$true] %s1115
      %1121 = dma.vmem_to_hbm [thread:$0]  %s1116, 2048, %s8, [#allocation4], 128, 128, 8
    $region57: #{tpu_custom_call.1} parent=1 // pred_fallthru
      _
    // Predicated region
    $region58: #{tpu_custom_call.1} parent=1 // pred_check
      _
    $region59: #{tpu_custom_call.1} parent=1 // pred_check_branch
      %1123 = sbr.rel (0) target = $region61
    $region60: #{tpu_custom_call.1} parent=1 // pred_region
      %1124 = dma.done [#allocation4], 2048
    $region61: #{tpu_custom_call.1} parent=1 // pred_fallthru
      _
    %1125 = vsyncpa [#allocation3], 1
    %1126 = vsyncpa [#allocation6], 1
    %1127 = vsyncpa [#allocation9], 1
    %1128 = vsyncpa [#allocation4], 1

</llo_original>
